<compile_context>
chip_gen: v6e
topology: v6e:2x2x1
jax: 0.10.0
libtpu: 0.0.40
codegen_flags: <defaults>
</compile_context>

<pallas_src>
import functools
import math

import jax
import jax.numpy as jnp
from jax import lax
from jax.experimental import pallas as pl
from jax.experimental.pallas import tpu as pltpu


# ------------------------------ small helpers --------------------------------

def _layer_norm(y, gamma, beta, eps):
    # nn.LayerNorm over the last dim (biased variance), f32 math.
    mean = jnp.mean(y, axis=-1, keepdims=True)
    var = jnp.mean((y - mean) ** 2, axis=-1, keepdims=True)
    return (y - mean) / jnp.sqrt(var + eps) * gamma + beta


def _gelu_exact(x):
    # x * 0.5 * (1 + erf(x / sqrt(2)))  -- matches FeedForward.gelu
    return x * 0.5 * (1.0 + lax.erf(x / math.sqrt(2.0)))


def _pick_tile(dim, target, align):
    """Largest tile <= target that divides `dim` and is a multiple of `align`
    (falls back to the full dim, which always satisfies the block rules)."""
    if dim <= target:
        return dim
    t = (target // align) * align
    while t >= align:
        if dim % t == 0:
            return t
        t -= align
    return dim


def _vmem_capacity_bytes():
    """Physical VMEM per TensorCore (64 MiB on v7x, 128 MiB on v5e/v6e)."""
    try:
        return int(pltpu.get_tpu_info().vmem_capacity_bytes)
    except Exception:
        return 128 * 1024 * 1024


@functools.lru_cache(maxsize=None)
def _single_buffer_supported():
    """True iff pl.Buffered(1) (single-buffered constant blocks) compiles and
    runs on this jax version / backend.  Probed once with a tiny kernel."""
    def _probe(x_ref, o_ref):
        o_ref[...] = x_ref[...] + 1.0
    try:
        spec = pl.BlockSpec((8, 128), lambda i: (0, 0),
                            pipeline_mode=pl.Buffered(1))
        out = pl.pallas_call(
            _probe, grid=(1,),
            in_specs=[spec],
            out_specs=pl.BlockSpec((8, 128), lambda i: (0, 0)),
            out_shape=jax.ShapeDtypeStruct((8, 128), jnp.float32),
        )(jnp.zeros((8, 128), jnp.float32))
        jax.block_until_ready(out)
        return True
    except Exception:
        return False


def _const_spec(shape, grid_rank):
    """Constant-index (weight) BlockSpec.  Single-buffered when supported so
    resident weights cost 1x VMEM instead of 2x (key for v7x's 64 MiB)."""
    zero = (0,) * len(shape)
    idx_map = {2: (lambda i, j: zero), 3: (lambda i, j, k: zero)}[grid_rank]
    if _single_buffer_supported():
        return pl.BlockSpec(shape, idx_map, pipeline_mode=pl.Buffered(1))
    return pl.BlockSpec(shape, idx_map)


# ---------------------- kernel 1: fused Q/K/V projection ----------------------

def _qkv_proj_kernel(x_ref, w_ref, b_ref, q_ref, k_ref, v_ref, *,
                     n_heads, head_dim):
    H = n_heads * head_dim
    x = x_ref[0].astype(jnp.bfloat16)                              # (tr, H)
    y = jnp.dot(x, w_ref[...], preferred_element_type=jnp.float32)  # (tr, 3H)
    y = (y + b_ref[...]).astype(jnp.bfloat16)
    # Head-major stores (B, nh, S, dh): static lane slices per head; no
    # host-side reshape/transpose HBM round trip afterwards.
    for h in range(n_heads):
        lo = h * head_dim
        q_ref[0, h] = y[:, lo:lo + head_dim]          # Wq/bq carry 1/sqrt(dh)
        k_ref[0, h] = y[:, H + lo:H + lo + head_dim]
        v_ref[0, h] = y[:, 2 * H + lo:2 * H + lo + head_dim]


def _qkv_projection(x, p, *, n_heads, tr, vmem_limit):
    B, S, H = x.shape
    dh = H // n_heads
    grid = (B, S // tr)
    x_spec = pl.BlockSpec((1, tr, H), lambda b, r: (b, r, 0))
    head_spec = pl.BlockSpec((1, n_heads, tr, dh), lambda b, r: (b, 0, r, 0))
    out_sd = jax.ShapeDtypeStruct((B, n_heads, S, dh), jnp.bfloat16)
    kernel = functools.partial(_qkv_proj_kernel, n_heads=n_heads, head_dim=dh)
    return pl.pallas_call(
        kernel,
        grid=grid,
        in_specs=[x_spec,
                  _const_spec(p["w_qkv"].shape, 2),
                  _const_spec(p["b_qkv"].shape, 2)],
        out_specs=(head_spec, head_spec, head_spec),
        out_shape=(out_sd, out_sd, out_sd),
        compiler_params=pltpu.CompilerParams(
            dimension_semantics=("parallel", "parallel"),
            vmem_limit_bytes=vmem_limit,
        ),
    )(x, p["w_qkv"], p["b_qkv"])


# -------- kernel 2: flash attention + output proj + LN + FFN + LN -------------

def _attn_ffn_kernel(x_ref, q_ref, k_ref, v_ref, mask_ref,
                     wd_ref, bd_ref, ln1g_ref, ln1b_ref,
                     w1_ref, b1_ref, w2_ref, b2_ref, ln2g_ref, ln2b_ref,
                     out_ref,
                     m_scr, l_scr, acc_scr,
                     *, n_heads, eps):
    ki = pl.program_id(2)
    nk = pl.num_programs(2)

    @pl.when(ki == 0)
    def _init():
        m_scr[...] = jnp.full_like(m_scr, -jnp.inf)
        l_scr[...] = jnp.zeros_like(l_scr)
        acc_scr[...] = jnp.zeros_like(acc_scr)

    qh = q_ref[0]                   # (nh, tq, dh) bf16, pre-scaled by 1/sqrt(dh)
    kh = k_ref[0]                   # (nh, tk, dh) bf16
    vh = v_ref[0]                   # (nh, tk, dh) bf16

    # All heads in one batched contraction (leading batch dim).
    s = jnp.einsum("hqd,hkd->hqk", qh, kh,
                   preferred_element_type=jnp.float32)      # (nh, tq, tk) f32
    s = s + mask_ref[0][None].astype(jnp.float32)           # broadcast over heads

    # Online (flash) softmax; normalization deferred to the epilogue.
    m_prev = m_scr[...]
    m_new = jnp.maximum(m_prev, jnp.max(s, axis=-1, keepdims=True))
    alpha = jnp.exp(m_prev - m_new)
    prob = jnp.exp(s - m_new)
    l_scr[...] = alpha * l_scr[...] + jnp.sum(prob, axis=-1, keepdims=True)
    acc_scr[...] = alpha * acc_scr[...] + jnp.einsum(
        "hqk,hkd->hqd", prob.astype(jnp.bfloat16), vh,
        preferred_element_type=jnp.float32)
    m_scr[...] = m_new

    @pl.when(ki == nk - 1)
    def _epilogue():
        x = x_ref[0].astype(jnp.float32)                    # (tq, H) residual
        ctx = acc_scr[...] * pl.reciprocal(l_scr[...], approx=True)
        ctx = ctx.astype(jnp.bfloat16)                      # (nh, tq, dh)

        # Output projection: sum_h ctx_h @ Wd[h]  (== concat_h(ctx_h) @ Wd),
        # so per-head pieces never need relayout / concatenation.
        # TODO(synk): relayout ctx -> (tq, H) and do one full-K matmul (better
        #             MXU fill on v6e/v7x) once the non-lane-aligned head-merge
        #             reshape is confirmed supported by Mosaic.
        attn = jnp.dot(ctx[0], wd_ref[0], preferred_element_type=jnp.float32)
        for h in range(1, n_heads):
            attn = attn + jnp.dot(ctx[h], wd_ref[h],
                                  preferred_element_type=jnp.float32)
        attn = attn + bd_ref[...]
        h1 = _layer_norm(attn + x, ln1g_ref[...], ln1b_ref[...], eps)

        ff = jnp.dot(h1.astype(jnp.bfloat16), w1_ref[...],
                     preferred_element_type=jnp.float32) + b1_ref[...]
        ff = _gelu_exact(ff)
        ff = jnp.dot(ff.astype(jnp.bfloat16), w2_ref[...],
                     preferred_element_type=jnp.float32) + b2_ref[...]
        out = _layer_norm(ff + h1, ln2g_ref[...], ln2b_ref[...], eps)
        out_ref[0] = out.astype(out_ref.dtype)


def _attn_ffn(x, qh, kh, vh, mask, p, *, n_heads, eps, tq, tk, vmem_limit):
    B, S, H = x.shape
    dh = H // n_heads
    grid = (B, S // tq, S // tk)

    xq_spec = pl.BlockSpec((1, tq, H), lambda b, qi, ki: (b, qi, 0))
    q_spec = pl.BlockSpec((1, n_heads, tq, dh), lambda b, qi, ki: (b, 0, qi, 0))
    kv_spec = pl.BlockSpec((1, n_heads, tk, dh), lambda b, qi, ki: (b, 0, ki, 0))
    if mask.shape[1] == 1:          # (B, 1, S) additive key mask (preferred)
        mask_spec = pl.BlockSpec((1, 1, tk), lambda b, qi, ki: (b, 0, ki))
    else:                           # full (B, S, S) additive mask (e.g. causal)
        mask_spec = pl.BlockSpec((1, tq, tk), lambda b, qi, ki: (b, qi, ki))

    w_names = ("wd", "bd", "ln1_g", "ln1_b", "w1", "b1", "w2", "b2",
               "ln2_g", "ln2_b")
    weights = [p[n] for n in w_names]
    w_specs = [_const_spec(w.shape, 3) for w in weights]

    kernel = functools.partial(_attn_ffn_kernel, n_heads=n_heads, eps=eps)

    return pl.pallas_call(
        kernel,
        grid=grid,
        in_specs=[xq_spec, q_spec, kv_spec, kv_spec, mask_spec] + w_specs,
        out_specs=pl.BlockSpec((1, tq, H), lambda b, qi, ki: (b, qi, 0)),
        out_shape=jax.ShapeDtypeStruct((B, S, H), jnp.bfloat16),
        scratch_shapes=[
            pltpu.VMEM((n_heads, tq, 1), jnp.float32),    # running max
            pltpu.VMEM((n_heads, tq, 1), jnp.float32),    # running denominator
            pltpu.VMEM((n_heads, tq, dh), jnp.float32),   # running P @ V
        ],
        compiler_params=pltpu.CompilerParams(
            dimension_semantics=("parallel", "parallel", "arbitrary"),
            vmem_limit_bytes=vmem_limit,
        ),
    )(x, qh, kh, vh, mask, *weights)


# ----------------------------- layer / encoder --------------------------------

def transformer_layer(x, mask, p, *, n_heads, eps, tiles, vmem_limit):
    tq, tk, tr = tiles
    q, k, v = _qkv_projection(x, p, n_heads=n_heads, tr=tr,
                              vmem_limit=vmem_limit)
    return _attn_ffn(x, q, k, v, mask, p, n_heads=n_heads, eps=eps,
                     tq=tq, tk=tk, vmem_limit=vmem_limit)


def transformer_encoder(hidden_states, attention_mask, layer_params, *,
                        n_heads, eps, output_all_encoded_layers=True,
                        vmem_limit=None):
    B, S, H = hidden_states.shape
    assert H % n_heads == 0, "hidden size must be a multiple of n_heads"

    cap = _vmem_capacity_bytes()
    if vmem_limit is None:
        # ~3/4 of physical VMEM (leave compiler-scratch headroom), <= 100 MB:
        # -> ~48 MiB on v7x (64 MiB parts), ~96 MiB on v5e/v6e (128 MiB parts).
        vmem_limit = int(min(cap * 3 // 4, 100 * 1024 * 1024))
    small_vmem = cap <= 64 * 1024 * 1024          # v7x-class part

    tq = _pick_tile(S, 128 if small_vmem else 256, 16)   # bf16 sublane packing
    tk = _pick_tile(S, 256 if small_vmem else 512, 128)  # lane dim of mask/scores
    tr = _pick_tile(S, 256, 16)                          # QKV-projection rows
    # v7x has 2 TensorCores: keep the parallel grid axes at combined extent >= 2.
    if B == 1 and (S // tq) < 2:
        half = _pick_tile(S, max(tq // 2, 16), 16)
        if S // half >= 2:
            tq = half

    x = hidden_states.astype(jnp.bfloat16)   # bf16 inter-layer activations
    prepped = [_prep_layer_params(p, n_heads) for p in layer_params]

    all_encoder_layers = []
    for p in prepped:
        x = transformer_layer(x, attention_mask, p, n_heads=n_heads, eps=eps,
                              tiles=(tq, tk, tr), vmem_limit=vmem_limit)
        if output_all_encoded_layers:
            all_encoder_layers.append(x)
    if not output_all_encoded_layers:
        all_encoder_layers.append(x)
    return all_encoder_layers


# ------------------------------- parameters -----------------------------------

def init_layer_params(key, hidden_size, inner_size):
    """Deterministic synthetic weights. Linear weights stored as (in, out) so
    the kernels compute x @ W + b (PyTorch stores (out, in) and does x@W.T+b)."""
    ks = jax.random.split(key, 8)
    s = 0.02
    H, I = hidden_size, inner_size
    return {
        "wq": s * jax.random.normal(ks[0], (H, H), jnp.float32),
        "bq": jnp.zeros((1, H), jnp.float32),
        "wk": s * jax.random.normal(ks[1], (H, H), jnp.float32),
        "bk": jnp.zeros((1, H), jnp.float32),
        "wv": s * jax.random.normal(ks[2], (H, H), jnp.float32),
        "bv": jnp.zeros((1, H), jnp.float32),
        "wd": s * jax.random.normal(ks[3], (H, H), jnp.float32),
        "bd": jnp.zeros((1, H), jnp.float32),
        "ln1_g": jnp.ones((1, H), jnp.float32),
        "ln1_b": jnp.zeros((1, H), jnp.float32),
        "w1": s * jax.random.normal(ks[4], (H, I), jnp.float32),
        "b1": jnp.zeros((1, I), jnp.float32),
        "w2": s * jax.random.normal(ks[5], (I, H), jnp.float32),
        "b2": jnp.zeros((1, H), jnp.float32),
        "ln2_g": jnp.ones((1, H), jnp.float32),
        "ln2_b": jnp.zeros((1, H), jnp.float32),
    }


def _prep_layer_params(p, n_heads):
    """Host-side weight prep: bf16 matmul weights, 1/sqrt(dh) folded into Wq/bq,
    Q/K/V weights fused into one (H, 3H) matrix, Wd pre-split per head as
    (n_heads, dh, H).  Biases / LN params stay f32."""
    H = p["wq"].shape[0]
    dh = H // n_heads
    scale = 1.0 / math.sqrt(dh)
    f32, bf16 = jnp.float32, jnp.bfloat16
    w_qkv = jnp.concatenate([p["wq"] * scale, p["wk"], p["wv"]], axis=1)
    b_qkv = jnp.concatenate([p["bq"] * scale, p["bk"], p["bv"]], axis=1)
    return {
        "w_qkv": w_qkv.astype(bf16),          # (H, 3H)
        "b_qkv": b_qkv.astype(f32),           # (1, 3H)
        "wd": p["wd"].reshape(n_heads, dh, H).astype(bf16),
        "bd": p["bd"].astype(f32),
        "ln1_g": p["ln1_g"].astype(f32),
        "ln1_b": p["ln1_b"].astype(f32),
        "w1": p["w1"].astype(bf16),
        "b1": p["b1"].astype(f32),
        "w2": p["w2"].astype(bf16),
        "b2": p["b2"].astype(f32),
        "ln2_g": p["ln2_g"].astype(f32),
        "ln2_b": p["ln2_b"].astype(f32),
    }


# ---------------------------------- main ---------------------------------------

if __name__ == "__main__":
    # Small config consistent with the module defaults (n_layers=2, n_heads=2).
    B, S = 2, 8
    n_layers, n_heads = 2, 2
    hidden_size, inner_size = 32, 64
    layer_norm_eps = 1e-12

    key = jax.random.PRNGKey(0)
    k_x, k_m, *k_layers = jax.random.split(key, 2 + n_layers)

    hidden_states = jax.random.normal(k_x, (B, S, hidden_size), jnp.float32)
    # Additive attention mask (0 = keep, -10000 = masked), shape (B, 1, S):
    # broadcast over heads and query positions inside the kernel.
    keep = (jax.random.uniform(k_m, (B, 1, S)) > 0.2).astype(jnp.float32)
    attention_mask = (1.0 - keep) * -10000.0

    layer_params = [init_layer_params(k, hidden_size, inner_size)
                    for k in k_layers]

    outs = transformer_encoder(
        hidden_states, attention_mask, layer_params,
        n_heads=n_heads, eps=layer_norm_eps, output_all_encoded_layers=True,
    )
    for o in outs:
        jax.block_until_ready(o)

    assert len(outs) == n_layers
    assert outs[-1].shape == (B, S, hidden_size)
    assert bool(jnp.all(jnp.isfinite(outs[-1].astype(jnp.float32))))
    print("KERNEL_OK")
</pallas_src>

<mosaic_0001>
module attributes {stable_mosaic.version = 11 : i64} {
  func.func @_probe(%arg0: i32, %arg1: memref<8x128xf32, #tpu.memory_space<vmem>>, %arg2: memref<8x128xf32, #tpu.memory_space<vmem>>) attributes {dimension_semantics = [#tpu.dimension_semantics<arbitrary>], iteration_bounds = array<i64: 1>, scalar_prefetch = 0 : i64, scratch_operands = 0 : i64, tpu.core_type = #tpu.core_type<tc>, window_params = [{pipeline_mode = #tpu.pipeline_mode<synchronous>, transform_indices = @transform_0, window_bounds = array<i64: 8, 128>}, {pipeline_mode = #tpu.pipeline_mode<synchronous>, transform_indices = @transform_1, window_bounds = array<i64: 8, 128>}]} {
    %c0 = arith.constant 0 : index
    %c0_0 = arith.constant 0 : index
    %0 = vector.load %arg1[%c0, %c0_0] : memref<8x128xf32, #tpu.memory_space<vmem>>, vector<8x128xf32>
    %cst = arith.constant 1.000000e+00 : f32
    %1 = vector.broadcast %cst : f32 to vector<8x128xf32>
    %2 = arith.addf %0, %1 : vector<8x128xf32>
    %c0_1 = arith.constant 0 : index
    %c0_2 = arith.constant 0 : index
    %3 = vector.load %arg2[%c0_1, %c0_2] : memref<8x128xf32, #tpu.memory_space<vmem>>, vector<8x128xf32>
    tpu.vector_store %arg2[%c0_1, %c0_2], %2 {strides = array<i32>} : memref<8x128xf32, #tpu.memory_space<vmem>>, vector<8x128xf32>,
    return
  }
  func.func @transform_0(%arg0: i32) -> (i32, i32) {
    %c0_i32 = arith.constant 0 : i32
    %c0_i32_0 = arith.constant 0 : i32
    %c0_i32_1 = arith.constant 0 : i32
    return %c0_i32, %c0_i32_0 : i32, i32
  }
  func.func @transform_1(%arg0: i32) -> (i32, i32) {
    %c0_i32 = arith.constant 0 : i32
    %c0_i32_0 = arith.constant 0 : i32
    %c0_i32_1 = arith.constant 0 : i32
    return %c0_i32, %c0_i32_0 : i32, i32
  }
}

module attributes {stable_mosaic.version = 11 : i64} {
  func.func @_qkv_proj_kernel(%arg0: i32, %arg1: i32, %arg2: memref<1x8x32xbf16, #tpu.memory_space<vmem>>, %arg3: memref<32x96xbf16, #tpu.memory_space<vmem>>, %arg4: memref<1x96xf32, #tpu.memory_space<vmem>>, %arg5: memref<1x2x8x16xbf16, #tpu.memory_space<vmem>>, %arg6: memref<1x2x8x16xbf16, #tpu.memory_space<vmem>>, %arg7: memref<1x2x8x16xbf16, #tpu.memory_space<vmem>>) attributes {dimension_semantics = [#tpu.dimension_semantics<parallel>, #tpu.dimension_semantics<parallel>], iteration_bounds = array<i64: 2, 1>, scalar_prefetch = 0 : i64, scratch_operands = 0 : i64, tpu.core_type = #tpu.core_type<tc>, window_params = [{transform_indices = @transform_0, window_bounds = array<i64: 1, 8, 32>}, {pipeline_mode = #tpu.pipeline_mode<synchronous>, transform_indices = @transform_1, window_bounds = array<i64: 32, 96>}, {pipeline_mode = #tpu.pipeline_mode<synchronous>, transform_indices = @transform_2, window_bounds = array<i64: 1, 96>}, {transform_indices = @transform_3, window_bounds = array<i64: 1, 2, 8, 16>}, {transform_indices = @transform_4, window_bounds = array<i64: 1, 2, 8, 16>}, {transform_indices = @transform_5, window_bounds = array<i64: 1, 2, 8, 16>}]} {
    %c0 = arith.constant 0 : index
    %c0_0 = arith.constant 0 : index
    %c0_1 = arith.constant 0 : index
    %0 = vector.load %arg2[%c0, %c0_0, %c0_1] : memref<1x8x32xbf16, #tpu.memory_space<vmem>>, vector<1x8x32xbf16>
    %1 = vector.shape_cast %0 : vector<1x8x32xbf16> to vector<8x32xbf16>
    %c0_2 = arith.constant 0 : index
    %c0_3 = arith.constant 0 : index
    %2 = vector.load %arg3[%c0_2, %c0_3] : memref<32x96xbf16, #tpu.memory_space<vmem>>, vector<32x96xbf16>
    %cst = arith.constant dense<0.000000e+00> : vector<8x96xf32>
    %3 = tpu.matmul %1, %2, %cst {dimension_numbers = #tpu.dot_dimension_numbers<[1], [0], [0], [1], [0, 0, 1, 1], [], []>} : vector<8x32xbf16>, vector<32x96xbf16>, vector<8x96xf32> -> vector<8x96xf32>
    %c0_4 = arith.constant 0 : index
    %c0_5 = arith.constant 0 : index
    %4 = vector.load %arg4[%c0_4, %c0_5] : memref<1x96xf32, #tpu.memory_space<vmem>>, vector<1x96xf32>
    %5 = vector.broadcast %4 : vector<1x96xf32> to vector<8x96xf32>
    %6 = arith.addf %3, %5 : vector<8x96xf32>
    %7 = arith.truncf %6 : vector<8x96xf32> to vector<8x96xbf16>
    %8 = vector.extract_strided_slice %7 {offsets = [0, 0], sizes = [8, 16], strides = [1, 1]} : vector<8x96xbf16> to vector<8x16xbf16>
    %c0_6 = arith.constant 0 : index
    %c0_7 = arith.constant 0 : index
    %c0_8 = arith.constant 0 : index
    %c0_9 = arith.constant 0 : index
    %9 = vector.load %arg5[%c0_6, %c0_7, %c0_8, %c0_9] : memref<1x2x8x16xbf16, #tpu.memory_space<vmem>>, vector<1x1x8x16xbf16>
    %10 = vector.shape_cast %9 : vector<1x1x8x16xbf16> to vector<8x16xbf16>
    %11 = vector.shape_cast %8 : vector<8x16xbf16> to vector<1x1x8x16xbf16>
    tpu.vector_store %arg5[%c0_6, %c0_7, %c0_8, %c0_9], %11 {strides = array<i32>} : memref<1x2x8x16xbf16, #tpu.memory_space<vmem>>, vector<1x1x8x16xbf16>,
    %12 = vector.extract_strided_slice %7 {offsets = [0, 32], sizes = [8, 16], strides = [1, 1]} : vector<8x96xbf16> to vector<8x16xbf16>
    %c0_10 = arith.constant 0 : index
    %c0_11 = arith.constant 0 : index
    %c0_12 = arith.constant 0 : index
    %c0_13 = arith.constant 0 : index
    %13 = vector.load %arg6[%c0_10, %c0_11, %c0_12, %c0_13] : memref<1x2x8x16xbf16, #tpu.memory_space<vmem>>, vector<1x1x8x16xbf16>
    %14 = vector.shape_cast %13 : vector<1x1x8x16xbf16> to vector<8x16xbf16>
    %15 = vector.shape_cast %12 : vector<8x16xbf16> to vector<1x1x8x16xbf16>
    tpu.vector_store %arg6[%c0_10, %c0_11, %c0_12, %c0_13], %15 {strides = array<i32>} : memref<1x2x8x16xbf16, #tpu.memory_space<vmem>>, vector<1x1x8x16xbf16>,
    %16 = vector.extract_strided_slice %7 {offsets = [0, 64], sizes = [8, 16], strides = [1, 1]} : vector<8x96xbf16> to vector<8x16xbf16>
    %c0_14 = arith.constant 0 : index
    %c0_15 = arith.constant 0 : index
    %c0_16 = arith.constant 0 : index
    %c0_17 = arith.constant 0 : index
    %17 = vector.load %arg7[%c0_14, %c0_15, %c0_16, %c0_17] : memref<1x2x8x16xbf16, #tpu.memory_space<vmem>>, vector<1x1x8x16xbf16>
    %18 = vector.shape_cast %17 : vector<1x1x8x16xbf16> to vector<8x16xbf16>
    %19 = vector.shape_cast %16 : vector<8x16xbf16> to vector<1x1x8x16xbf16>
    tpu.vector_store %arg7[%c0_14, %c0_15, %c0_16, %c0_17], %19 {strides = array<i32>} : memref<1x2x8x16xbf16, #tpu.memory_space<vmem>>, vector<1x1x8x16xbf16>,
    %20 = vector.extract_strided_slice %7 {offsets = [0, 16], sizes = [8, 16], strides = [1, 1]} : vector<8x96xbf16> to vector<8x16xbf16>
    %c0_18 = arith.constant 0 : index
    %c1 = arith.constant 1 : index
    %c0_19 = arith.constant 0 : index
    %c0_20 = arith.constant 0 : index
    %21 = vector.load %arg5[%c0_18, %c1, %c0_19, %c0_20] : memref<1x2x8x16xbf16, #tpu.memory_space<vmem>>, vector<1x1x8x16xbf16>
    %22 = vector.shape_cast %21 : vector<1x1x8x16xbf16> to vector<8x16xbf16>
    %23 = vector.shape_cast %20 : vector<8x16xbf16> to vector<1x1x8x16xbf16>
    tpu.vector_store %arg5[%c0_18, %c1, %c0_19, %c0_20], %23 {strides = array<i32>} : memref<1x2x8x16xbf16, #tpu.memory_space<vmem>>, vector<1x1x8x16xbf16>,
    %24 = vector.extract_strided_slice %7 {offsets = [0, 48], sizes = [8, 16], strides = [1, 1]} : vector<8x96xbf16> to vector<8x16xbf16>
    %c0_21 = arith.constant 0 : index
    %c1_22 = arith.constant 1 : index
    %c0_23 = arith.constant 0 : index
    %c0_24 = arith.constant 0 : index
    %25 = vector.load %arg6[%c0_21, %c1_22, %c0_23, %c0_24] : memref<1x2x8x16xbf16, #tpu.memory_space<vmem>>, vector<1x1x8x16xbf16>
    %26 = vector.shape_cast %25 : vector<1x1x8x16xbf16> to vector<8x16xbf16>
    %27 = vector.shape_cast %24 : vector<8x16xbf16> to vector<1x1x8x16xbf16>
    tpu.vector_store %arg6[%c0_21, %c1_22, %c0_23, %c0_24], %27 {strides = array<i32>} : memref<1x2x8x16xbf16, #tpu.memory_space<vmem>>, vector<1x1x8x16xbf16>,
    %28 = vector.extract_strided_slice %7 {offsets = [0, 80], sizes = [8, 16], strides = [1, 1]} : vector<8x96xbf16> to vector<8x16xbf16>
    %c0_25 = arith.constant 0 : index
    %c1_26 = arith.constant 1 : index
    %c0_27 = arith.constant 0 : index
    %c0_28 = arith.constant 0 : index
    %29 = vector.load %arg7[%c0_25, %c1_26, %c0_27, %c0_28] : memref<1x2x8x16xbf16, #tpu.memory_space<vmem>>, vector<1x1x8x16xbf16>
    %30 = vector.shape_cast %29 : vector<1x1x8x16xbf16> to vector<8x16xbf16>
    %31 = vector.shape_cast %28 : vector<8x16xbf16> to vector<1x1x8x16xbf16>
    tpu.vector_store %arg7[%c0_25, %c1_26, %c0_27, %c0_28], %31 {strides = array<i32>} : memref<1x2x8x16xbf16, #tpu.memory_space<vmem>>, vector<1x1x8x16xbf16>,
    return
  }
  func.func @transform_0(%arg0: i32, %arg1: i32) -> (i32, i32, i32) {
    %c0_i32 = arith.constant 0 : i32
    %c0_i32_0 = arith.constant 0 : i32
    return %arg0, %arg1, %c0_i32 : i32, i32, i32
  }
  func.func @transform_1(%arg0: i32, %arg1: i32) -> (i32, i32) {
    %c0_i32 = arith.constant 0 : i32
    %c0_i32_0 = arith.constant 0 : i32
    %c0_i32_1 = arith.constant 0 : i32
    return %c0_i32, %c0_i32_0 : i32, i32
  }
  func.func @transform_2(%arg0: i32, %arg1: i32) -> (i32, i32) {
    %c0_i32 = arith.constant 0 : i32
    %c0_i32_0 = arith.constant 0 : i32
    %c0_i32_1 = arith.constant 0 : i32
    return %c0_i32, %c0_i32_0 : i32, i32
  }
  func.func @transform_3(%arg0: i32, %arg1: i32) -> (i32, i32, i32, i32) {
    %c0_i32 = arith.constant 0 : i32
    %c0_i32_0 = arith.constant 0 : i32
    %c0_i32_1 = arith.constant 0 : i32
    return %arg0, %c0_i32, %arg1, %c0_i32_0 : i32, i32, i32, i32
  }
  func.func @transform_4(%arg0: i32, %arg1: i32) -> (i32, i32, i32, i32) {
    %c0_i32 = arith.constant 0 : i32
    %c0_i32_0 = arith.constant 0 : i32
    %c0_i32_1 = arith.constant 0 : i32
    return %arg0, %c0_i32, %arg1, %c0_i32_0 : i32, i32, i32, i32
  }
  func.func @transform_5(%arg0: i32, %arg1: i32) -> (i32, i32, i32, i32) {
    %c0_i32 = arith.constant 0 : i32
    %c0_i32_0 = arith.constant 0 : i32
    %c0_i32_1 = arith.constant 0 : i32
    return %arg0, %c0_i32, %arg1, %c0_i32_0 : i32, i32, i32, i32
  }
}

</mosaic_0001>

<llo_original>
// kernel: tpu_custom_call.1
$region0: #{tpu_custom_call.1}
  #allocation0 [shape = 'u32[]', space=smem, size = 0x4, offset = 0x4, fixed_abs, tag = 'smem constant byte address 0x4 - core index']
  #allocation1 [shape = 'u32[144,128]{1,0:T(1,128)}', space=vmem, size = 0x12000, scoped, tag = 'internal scratch']
  %s0 = inlined_call_operand.hbm [shape: f32[8,128], index: 0, kind: input, shape index: {}]
  %s1 = inlined_call_operand.hbm [shape: f32[8,128], index: 1, kind: output, shape index: {}]
  %s2 = sld [smem:[#allocation0]]
  $region18: #{tpu_custom_call.1} parent=0
    _
  %s4 = ssub.s32 1, %s2
  %s5 = scalar_select 0, %s4, %s2
  $region1: #{tpu_custom_call.1} parent=0
    #allocation2 [shape = 'u8[4096]{0}', space=vmem, size = 0x1000, scoped, tag = 'input window, operand 0, single buffered']
    #allocation3 [shape = 's32[1]{0}', space=sflag, size = 0x4, scoped, tag = 'scoped memory for tpu_custom_call.1']
    #allocation4 [shape = 's32[1]{0}', space=sflag, size = 0x4, scoped, tag = 'scoped memory for tpu_custom_call.1']
    #allocation5 [shape = 'u8[4096]{0}', space=vmem, size = 0x1000, scoped, tag = 'output window, operand 0, single buffered']
    %6 = vsyncpa [#allocation3], 0
    %7 = vsyncpa [#allocation4], 0
    // Predicated region
    $region2: #{tpu_custom_call.1} parent=1 // pred_check
      _
    $region3: #{tpu_custom_call.1} parent=1 // pred_check_branch
      %9 = sbr.rel (0) target = $region5
    $region4: #{tpu_custom_call.1} parent=1 // pred_region
      %s11 = ssub.s32 128, 128
      %12 = vsyncadd [#allocation3], %s11
      %s14 = sshll.u32 [#allocation2], 4
      %s15 = int_to_ptr.vmem [resolvable:$true] %s14
      %17 = dma.hbm_to_vmem [thread:$0]  %s0, 128, %s15, [#allocation3]
    $region5: #{tpu_custom_call.1} parent=1 // pred_fallthru
      _
    // Predicated region
    $region6: #{tpu_custom_call.1} parent=1 // pred_check
      _
    $region7: #{tpu_custom_call.1} parent=1 // pred_check_branch
      %19 = sbr.rel (0) target = $region9
    $region8: #{tpu_custom_call.1} parent=1 // pred_region
      %20 = dma.done [#allocation3], 128
    $region9: #{tpu_custom_call.1} parent=1 // pred_fallthru
      _
    %v21 = vld [vmem:[#allocation2] sm:$0xff]
    %v22 = vadd.f32 %v21, 1.0
    %23 = vst [vmem:[#allocation5] sm:$0xff] %v22
    // Predicated region
    $region10: #{tpu_custom_call.1} parent=1 // pred_check
      _
    $region11: #{tpu_custom_call.1} parent=1 // pred_check_branch
      %25 = sbr.rel (0) target = $region13
    $region12: #{tpu_custom_call.1} parent=1 // pred_region
      %s27 = ssub.s32 128, 128
      %28 = vsyncadd [#allocation4], %s27
      %s30 = sshll.u32 [#allocation5], 4
      %s31 = int_to_ptr.vmem [resolvable:$true] %s30
      %33 = dma.vmem_to_hbm [thread:$0]  %s31, 128, %s1, [#allocation4]
    $region13: #{tpu_custom_call.1} parent=1 // pred_fallthru
      _
    // Predicated region
    $region14: #{tpu_custom_call.1} parent=1 // pred_check
      _
    $region15: #{tpu_custom_call.1} parent=1 // pred_check_branch
      %35 = sbr.rel (0) target = $region17
    $region16: #{tpu_custom_call.1} parent=1 // pred_region
      %36 = dma.done [#allocation4], 128
    $region17: #{tpu_custom_call.1} parent=1 // pred_fallthru
      _
    %37 = vsyncpa [#allocation3], 1
    %38 = vsyncpa [#allocation4], 1

// kernel: tpu_custom_call.1
$region0: #{tpu_custom_call.1}
  #allocation0 [shape = 'u32[]', space=smem, size = 0x4, offset = 0x4, fixed_abs, tag = 'smem constant byte address 0x4 - core index']
  #allocation1 [shape = 'u32[144,128]{1,0:T(1,128)}', space=vmem, size = 0x12000, scoped, tag = 'internal scratch']
  %s0 = inlined_call_operand.hbm [shape: bf16[2,8,32], index: 0, kind: input, shape index: {}]
  %s1 = inlined_call_operand.hbm [shape: bf16[32,96], index: 1, kind: input, shape index: {}]
  %s2 = inlined_call_operand.vmem [shape: f32[1,96], index: 2, kind: input, shape index: {}]
  %s3 = inlined_call_operand.hbm [shape: bf16[2,2,8,16], index: 3, kind: output, shape index: {0}]
  %s4 = inlined_call_operand.hbm [shape: bf16[2,2,8,16], index: 4, kind: output, shape index: {1}]
  %s5 = inlined_call_operand.hbm [shape: bf16[2,2,8,16], index: 5, kind: output, shape index: {2}]
  %6 = xla_tuple %s3, %s4, %s5
  %s7 = sld [smem:[#allocation0]]
  $region69: #{tpu_custom_call.1} parent=0
    _
  %s9 = ssub.s32 1, %s7
  %s10 = scalar_select 0, %s9, %s7
  $region1: #{tpu_custom_call.1} parent=0
    #allocation2 [shape = 'u8[4096]{0}', space=vmem, size = 0x1000, scoped, tag = 'input window, operand 0']
    #allocation3 [shape = 's32[2]{0}', space=sflag, size = 0x8, scoped, tag = 'scoped memory for tpu_custom_call.1']
    #allocation4 [shape = 's32[2]{0}', space=sflag, size = 0x8, scoped, tag = 'scoped memory for tpu_custom_call.1']
    #allocation5 [shape = 'u8[8192]{0}', space=vmem, size = 0x2000, scoped, tag = 'input window, operand 1, single buffered']
    #allocation6 [shape = 's32[1]{0}', space=sflag, size = 0x4, scoped, tag = 'scoped memory for tpu_custom_call.1']
    #allocation7 [shape = 'u8[8192]{0}', space=vmem, size = 0x2000, scoped, tag = 'output window, operand 0']
    #allocation8 [shape = 'u8[8192]{0}', space=vmem, size = 0x2000, scoped, tag = 'output window, operand 1']
    #allocation9 [shape = 's32[2]{0}', space=sflag, size = 0x8, scoped, tag = 'scoped memory for tpu_custom_call.1']
    #allocation10 [shape = 'u8[8192]{0}', space=vmem, size = 0x2000, scoped, tag = 'output window, operand 2']
    %11 = vsyncpa [#allocation3], 0
    %s12 = scalar_lea.sflag [#allocation3], 1
    %13 = vsyncpa %s12, 0
    %14 = vsyncpa [#allocation6], 0
    %15 = vsyncpa [#allocation4], 0
    %s16 = scalar_lea.sflag [#allocation4], 1
    %17 = vsyncpa %s16, 0
    %18 = vsyncpa [#allocation9], 0
    %s19 = scalar_lea.sflag [#allocation9], 1
    %20 = vsyncpa %s19, 0
    loop: start=0, step=1, limit=4
    $region2: #{tpu_custom_call.1} parent=1 // loop_pre_header
      _
    $region3: #{tpu_custom_call.1} parent=1 // loop_header
      %s22 = sphi 0, %s26
      %p23 = scmp.ge.s32.totalorder %s22, 4
      %s29 = sphi 0, %s41
      %s30 = sphi 0, %s37
      %s31 = sphi 0, %s29
      %s32 = sphi 0, %s30
      %s33 = sphi 0, %s31
      %s34 = sphi 0, %s32
      %s46 = sphi 0, %s48
      %s49 = sphi 0, %s46
      %s50 = sphi 0, %s49
      %s66 = sphi 0, %s50
      %s70 = sphi 0, %s70
      %s72 = sphi 0, %s70
      %s73 = sphi 0, %s72
      %s87 = sphi 0, %s73
      %s91 = sphi 0, %s91
      %s93 = sphi 0, %s91
      %s94 = sphi 0, %s93
      %s108 = sphi 0, %s94
      %s116 = sphi 0, %s118
      %s119 = sphi 0, %s116
      %s120 = sphi 0, %s119
      %s136 = sphi 0, %s120
      %s144 = sphi 0, %s146
      %s147 = sphi 0, %s144
      %s148 = sphi 0, %s147
      %s164 = sphi 0, %s148
      %s172 = sphi 0, %s174
      %s175 = sphi 0, %s172
      %s176 = sphi 0, %s175
      %s192 = sphi 0, %s176
    $region4: #{tpu_custom_call.1} parent=1 // loop_header_branch
      %25 = sbr.rel (%p23) target = $region8
    $region5: #{tpu_custom_call.1} parent=1 // loop_body
      %s27 = ssub.s32 %s22, 1
      %s28 = ssub.s32 %s22, 2
      %s35 = sadd.s32 1, %s30
      %p36 = scmp.ge.s32.totalorder %s35, 1
      %s37 = scalar_select %p36, 0, %s35
      %s38 = sadd.s32 1, %s29
      %s39 = scalar_select %p36, %s38, %s29
      %p40 = scmp.ge.s32.totalorder %s39, 2
      %s41 = scalar_select %p40, 0, %s39
      %s42 = ssub.s32 %s29, %s41
      %s43 = ssub.s32 %s30, %s37
      %s44 = sor.u32 %s42, %s43
      %p45 = scmp.eq.s32.totalorder %s44, 0
      %s47 = sadd.s32 %s46, 1
      %s48 = scalar_select %p45, %s46, %s47
      %p51 = pneg %p45
      %p52 = scmp.eq.s32.totalorder %s22, 1
      %p53 = por %p51, %p52
      %p54 = scmp.ne.s32.totalorder %s46, %s49
      %p55 = scmp.eq.s32.totalorder %s22, 0
      %p56 = por %p54, %p55
      %p57 = scmp.ne.s32.totalorder %s46, %s49
      %p58 = scmp.eq.s32.totalorder %s27, 1
      %p59 = por %p57, %p58
      %p60 = scmp.ne.s32.totalorder %s49, %s50
      %p61 = scmp.eq.s32.totalorder %s27, 0
      %p62 = por %p60, %p61
      %p63 = scmp.ne.s32.totalorder %s49, %s50
      %p64 = scmp.eq.s32.totalorder %s28, 1
      %p65 = por %p63, %p64
      %p67 = scmp.ne.s32.totalorder %s50, %s66
      %p68 = scmp.eq.s32.totalorder %s28, 0
      %p69 = por %p67, %p68
      %s71 = sadd.s32 %s70, 1
      %p74 = scmp.eq.s32.totalorder %s22, 1
      %p75 = scmp.ne.s32.totalorder %s70, %s72
      %p76 = scmp.eq.s32.totalorder %s22, 0
      %p77 = por %p75, %p76
      %p78 = scmp.ne.s32.totalorder %s70, %s72
      %p79 = scmp.eq.s32.totalorder %s27, 1
      %p80 = por %p78, %p79
      %p81 = scmp.ne.s32.totalorder %s72, %s73
      %p82 = scmp.eq.s32.totalorder %s27, 0
      %p83 = por %p81, %p82
      %p84 = scmp.ne.s32.totalorder %s72, %s73
      %p85 = scmp.eq.s32.totalorder %s28, 1
      %p86 = por %p84, %p85
      %p88 = scmp.ne.s32.totalorder %s73, %s87
      %p89 = scmp.eq.s32.totalorder %s28, 0
      %p90 = por %p88, %p89
      %s92 = sadd.s32 %s91, 1
      %p95 = scmp.eq.s32.totalorder %s22, 1
      %p96 = scmp.ne.s32.totalorder %s91, %s93
      %p97 = scmp.eq.s32.totalorder %s22, 0
      %p98 = por %p96, %p97
      %p99 = scmp.ne.s32.totalorder %s91, %s93
      %p100 = scmp.eq.s32.totalorder %s27, 1
      %p101 = por %p99, %p100
      %p102 = scmp.ne.s32.totalorder %s93, %s94
      %p103 = scmp.eq.s32.totalorder %s27, 0
      %p104 = por %p102, %p103
      %p105 = scmp.ne.s32.totalorder %s93, %s94
      %p106 = scmp.eq.s32.totalorder %s28, 1
      %p107 = por %p105, %p106
      %p109 = scmp.ne.s32.totalorder %s94, %s108
      %p110 = scmp.eq.s32.totalorder %s28, 0
      %p111 = por %p109, %p110
      %s112 = ssub.s32 %s29, %s41
      %s113 = ssub.s32 %s30, %s37
      %s114 = sor.u32 %s112, %s113
      %p115 = scmp.eq.s32.totalorder %s114, 0
      %s117 = sadd.s32 %s116, 1
      %s118 = scalar_select %p115, %s116, %s117
      %p121 = pneg %p115
      %p122 = scmp.eq.s32.totalorder %s22, 1
      %p123 = por %p121, %p122
      %p124 = scmp.ne.s32.totalorder %s116, %s119
      %p125 = scmp.eq.s32.totalorder %s22, 0
      %p126 = por %p124, %p125
      %p127 = scmp.ne.s32.totalorder %s116, %s119
      %p128 = scmp.eq.s32.totalorder %s27, 1
      %p129 = por %p127, %p128
      %p130 = scmp.ne.s32.totalorder %s119, %s120
      %p131 = scmp.eq.s32.totalorder %s27, 0
      %p132 = por %p130, %p131
      %p133 = scmp.ne.s32.totalorder %s119, %s120
      %p134 = scmp.eq.s32.totalorder %s28, 1
      %p135 = por %p133, %p134
      %p137 = scmp.ne.s32.totalorder %s120, %s136
      %p138 = scmp.eq.s32.totalorder %s28, 0
      %p139 = por %p137, %p138
      %s140 = ssub.s32 %s29, %s41
      %s141 = ssub.s32 %s30, %s37
      %s142 = sor.u32 %s140, %s141
      %p143 = scmp.eq.s32.totalorder %s142, 0
      %s145 = sadd.s32 %s144, 1
      %s146 = scalar_select %p143, %s144, %s145
      %p149 = pneg %p143
      %p150 = scmp.eq.s32.totalorder %s22, 1
      %p151 = por %p149, %p150
      %p152 = scmp.ne.s32.totalorder %s144, %s147
      %p153 = scmp.eq.s32.totalorder %s22, 0
      %p154 = por %p152, %p153
      %p155 = scmp.ne.s32.totalorder %s144, %s147
      %p156 = scmp.eq.s32.totalorder %s27, 1
      %p157 = por %p155, %p156
      %p158 = scmp.ne.s32.totalorder %s147, %s148
      %p159 = scmp.eq.s32.totalorder %s27, 0
      %p160 = por %p158, %p159
      %p161 = scmp.ne.s32.totalorder %s147, %s148
      %p162 = scmp.eq.s32.totalorder %s28, 1
      %p163 = por %p161, %p162
      %p165 = scmp.ne.s32.totalorder %s148, %s164
      %p166 = scmp.eq.s32.totalorder %s28, 0
      %p167 = por %p165, %p166
      %s168 = ssub.s32 %s29, %s41
      %s169 = ssub.s32 %s30, %s37
      %s170 = sor.u32 %s168, %s169
      %p171 = scmp.eq.s32.totalorder %s170, 0
      %s173 = sadd.s32 %s172, 1
      %s174 = scalar_select %p171, %s172, %s173
      %p177 = pneg %p171
      %p178 = scmp.eq.s32.totalorder %s22, 1
      %p179 = por %p177, %p178
      %p180 = scmp.ne.s32.totalorder %s172, %s175
      %p181 = scmp.eq.s32.totalorder %s22, 0
      %p182 = por %p180, %p181
      %p183 = scmp.ne.s32.totalorder %s172, %s175
      %p184 = scmp.eq.s32.totalorder %s27, 1
      %p185 = por %p183, %p184
      %p186 = scmp.ne.s32.totalorder %s175, %s176
      %p187 = scmp.eq.s32.totalorder %s27, 0
      %p188 = por %p186, %p187
      %p189 = scmp.ne.s32.totalorder %s175, %s176
      %p190 = scmp.eq.s32.totalorder %s28, 1
      %p191 = por %p189, %p190
      %p193 = scmp.ne.s32.totalorder %s176, %s192
      %p194 = scmp.eq.s32.totalorder %s28, 0
      %p195 = por %p193, %p194
      %p196 = scmp.le.s32.totalorder 1, %s22
      %p197 = scmp.lt.s32.totalorder %s22, 3
      %p198 = pnand %p196, %p197
      %p199 = pneg %p198
      // Predicated region
      $region9: #{tpu_custom_call.1} parent=5 // pred_check
        _
      $region10: #{tpu_custom_call.1} parent=5 // pred_check_branch
        %201 = sbr.rel (%p198) target = $region12
      $region11: #{tpu_custom_call.1} parent=5 // pred_region
        %s202 = ssub.s32 %s22, 1
        // Predicated region
        $region13: #{tpu_custom_call.1} parent=11 // pred_check
          %p203 = pneg %p83
        $region14: #{tpu_custom_call.1} parent=11 // pred_check_branch
          %205 = sbr.rel (%p203) target = $region16
        $region15: #{tpu_custom_call.1} parent=11 // pred_region
          %s207 = ssub.s32 256, 256
          %208 = vsyncadd [#allocation6], %s207
          %s209 = sshll.u32 [#allocation5], 4
          %s210 = int_to_ptr.vmem [resolvable:$true] %s209
          %215 = dma.hbm_to_vmem [thread:$0]  %s1, 256, %s210, [#allocation6], 64, 64, 4
        $region16: #{tpu_custom_call.1} parent=11 // pred_fallthru
          _
        // Predicated region
        $region17: #{tpu_custom_call.1} parent=11 // pred_check
          %p216 = pneg %p104
        $region18: #{tpu_custom_call.1} parent=11 // pred_check_branch
          %218 = sbr.rel (%p216) target = $region20
        $region19: #{tpu_custom_call.1} parent=11 // pred_region
          _
        $region20: #{tpu_custom_call.1} parent=11 // pred_fallthru
          _
      $region12: #{tpu_custom_call.1} parent=5 // pred_fallthru
        _
      %p219 = scmp.lt.s32.totalorder %s22, 2
      // Predicated region
      $region21: #{tpu_custom_call.1} parent=5 // pred_check
        %p220 = pneg %p219
      $region22: #{tpu_custom_call.1} parent=5 // pred_check_branch
        %222 = sbr.rel (%p220) target = $region24
      $region23: #{tpu_custom_call.1} parent=5 // pred_region
        // Predicated region
        $region25: #{tpu_custom_call.1} parent=23 // pred_check
          %p223 = pneg %p56
        $region26: #{tpu_custom_call.1} parent=23 // pred_check_branch
          %225 = sbr.rel (%p223) target = $region28
        $region27: #{tpu_custom_call.1} parent=23 // pred_region
          %s226 = sand.u32 %s46, 1
          %s227 = scalar_lea.sflag [#allocation3], %s226
          %s228 = sand.u32 %s46, 1
          %s229 = smul.addr %s228, 4
          %s230 = scalar_lea.vmem [#allocation2], %s229
          %s232 = ssub.s32 64, 64
          %233 = vsyncadd %s227, %s232
          %s234 = sadd.s32 %s30, %s29
          %s235 = smul.addr %s234, 64
          %s236 = scalar_lea.hbm %s0, %s235
          %s238 = sshll.u32 %s230, 4
          %s239 = int_to_ptr.vmem [resolvable:$true] %s238
          %241 = dma.hbm_to_vmem [thread:$0]  %s236, 64, %s239, %s227
        $region28: #{tpu_custom_call.1} parent=23 // pred_fallthru
          _
      $region24: #{tpu_custom_call.1} parent=5 // pred_fallthru
        _
      %p242 = scmp.le.s32.totalorder 1, %s22
      %p243 = scmp.lt.s32.totalorder %s22, 3
      %p244 = pnand %p242, %p243
      %p245 = pneg %p244
      // Predicated region
      $region29: #{tpu_custom_call.1} parent=5 // pred_check
        _
      $region30: #{tpu_custom_call.1} parent=5 // pred_check_branch
        %247 = sbr.rel (%p244) target = $region32
      $region31: #{tpu_custom_call.1} parent=5 // pred_region
        %s248 = ssub.s32 %s22, 1
        %s249 = sand.u32 %s49, 1
        %s250 = scalar_lea.sflag [#allocation3], %s249
        %s251 = sand.u32 %s49, 1
        %s252 = smul.addr %s251, 4
        %s253 = scalar_lea.vmem [#allocation2], %s252
        // Predicated region
        $region33: #{tpu_custom_call.1} parent=31 // pred_check
          %p254 = pneg %p62
        $region34: #{tpu_custom_call.1} parent=31 // pred_check_branch
          %256 = sbr.rel (%p254) target = $region36
        $region35: #{tpu_custom_call.1} parent=31 // pred_region
          %257 = dma.done %s250, 64
        $region36: #{tpu_custom_call.1} parent=31 // pred_fallthru
          _
        // Predicated region
        $region37: #{tpu_custom_call.1} parent=31 // pred_check
          %p258 = pneg %p83
        $region38: #{tpu_custom_call.1} parent=31 // pred_check_branch
          %260 = sbr.rel (%p258) target = $region40
        $region39: #{tpu_custom_call.1} parent=31 // pred_region
          %261 = dma.done [#allocation6], 256
        $region40: #{tpu_custom_call.1} parent=31 // pred_fallthru
          _
        %s262 = sand.u32 %s49, 1
        %s263 = scalar_lea.sflag [#allocation3], %s262
        %s264 = sand.u32 %s49, 1
        %s265 = smul.addr %s264, 4
        %s266 = scalar_lea.vmem [#allocation2], %s265
        %p267 = pneg %p62
        %p268 = pneg %p59
        %p269 = pneg %p83
        %p270 = pneg %p80
        %p271 = pneg %p104
        %p272 = pneg %p101
        %p273 = pneg %p132
        %p274 = pneg %p129
        %s275 = sand.u32 %s119, 1
        %s276 = scalar_lea.sflag [#allocation4], %s275
        %s277 = sand.u32 %s119, 1
        %s278 = smul.addr %s277, 8
        %s279 = scalar_lea.vmem [#allocation7], %s278
        %p280 = pneg %p160
        %p281 = pneg %p157
        %s282 = sand.u32 %s27, 1
        %s283 = scalar_lea.sflag [#allocation9], %s282
        %s284 = sand.u32 %s147, 1
        %s285 = smul.addr %s284, 8
        %s286 = scalar_lea.vmem [#allocation8], %s285
        %p287 = pneg %p188
        %p288 = pneg %p185
        %s289 = sand.u32 %s27, 1
        %s290 = scalar_lea.sflag [#allocation9], %s289
        %s291 = sand.u32 %s175, 1
        %s292 = smul.addr %s291, 8
        %s293 = scalar_lea.vmem [#allocation10], %s292
        %v295 = vld [vmem:[%s253] sm:$0xf]
        %v296 = vld [vmem:[#allocation5] sm:$0xf]
        %v297 = vld [vmem:[#allocation5 + $0x4] sm:$0xf]
        %v298 = vld [vmem:[#allocation5 + $0x8] sm:$0xf]
        %v299 = vld [vmem:[#allocation5 + $0xc] sm:$0xf]
        %v300 = vld [vmem:[%s2] sm:$0x1]
        %v302 = vlaneseq
        %v303 = vshrl.u32 %v302, 7
        %v304 = vsub.s32 0, %v303
        %v305 = vrot.slane %v300, %v304
        %v311 = vunpack.c.l.b16 %v296
        %v312 = vunpack.c.l.b16 %v297
        %v313 = vunpack.c.l.b16 %v298
        %v314 = vunpack.c.l.b16 %v299
        %v315 = vpack.c.b16 %v312, %v311
        %v316 = vpack.c.b16 %v314, %v313
        %vm319 = vcmask 261120
        %v321 = vsel %vm319, %v295, 0
        %323 = vmatprep.subr.bf16.mxu0 0
        %324 = vmatpush1.bf16.msra.mxu0 0
        %325 = vmatprep.subr.bf16.mxu0 0
        %326 = vmatpush1.bf16.msra.mxu0 0
        %327 = vmatprep.subr.bf16.mxu0 0
        %328 = vmatpush1.bf16.msra.mxu0 0
        %329 = vmatprep.subr.bf16.mxu0 0
        %330 = vmatpush1.bf16.msra.mxu0 0
        %331 = vmatprep.subr.bf16.mxu0 0
        %332 = vmatpush1.bf16.msra.mxu0 0
        %333 = vmatprep.subr.bf16.mxu0 0
        %334 = vmatpush1.bf16.msra.mxu0 0
        %335 = vmatprep.subr.bf16.mxu0 0
        %336 = vmatpush1.bf16.msra.mxu0 %v316
        %337 = vmatprep.subr.bf16.mxu0 0
        %338 = vmatpush1.bf16.msra.mxu0 %v315
        %339 = vmatprep.subr.bf16.mxu0 0
        %340 = vmatpush2.bf16.msra.mxu0 0
        %341 = vmatprep.subr.bf16.mxu0 0
        %342 = vmatpush2.bf16.msra.mxu0 0
        %343 = vmatprep.subr.bf16.mxu0 0
        %344 = vmatpush2.bf16.msra.mxu0 0
        %345 = vmatprep.subr.bf16.mxu0 0
        %346 = vmatpush2.bf16.msra.mxu0 0
        %347 = vmatprep.subr.bf16.mxu0 0
        %348 = vmatpush2.bf16.msra.mxu0 0
        %349 = vmatprep.subr.bf16.mxu0 0
        %350 = vmatpush2.bf16.msra.mxu0 0
        %351 = vmatprep.subr.bf16.mxu0 0
        %352 = vmatpush2.bf16.msra.mxu0 0
        %353 = vmatprep.subr.bf16.mxu0 0
        %354 = vmatpush2.bf16.msra.mxu0 0
        %355 = vmatprep.mubr.bf16.mxu0 0
        %356 = vmatmul.mubr.bf16.gmra.mxu0 %v321
        %v357 = vpop.f32.mrf.mxu0
        %v358 = vadd.f32 %v305, %v357
        %v359 = vpop.f32.mrf.mxu0
        %v360 = vpop.f32.mrf.mxu0
        %v361 = vpop.f32.mrf.mxu0
        %362 = vdwg.mxu0
        %v363 = vpack.c.bf16 %v358, %v358
        %vm364 = vcmask 125952
        %365 = vst.msk [vmem:[%s279] sm:$0xf] %vm364, %v363
        %v367 = vunpack.c.l.b16 %v363
        %v368 = vpack.c.b16 %v367, %v367
        %369 = vrot.lane.b32.xlu0 %v368, 96
        %v370 = vpop.permute.xlu0 %369
        %372 = vst.msk [vmem:[%s286] sm:$0xf] %vm364, %v370
        %373 = vrot.lane.b32.xlu0 %v368, 64
        %v374 = vpop.permute.xlu0 %373
        %376 = vst.msk [vmem:[%s293] sm:$0xf] %vm364, %v374
        %377 = vrot.lane.b32.xlu0 %v368, 112
        %v378 = vpop.permute.xlu0 %377
        %s380 = scalar_lea.vmem %s279, 4 [#allocation7]
        %381 = vst.msk [vmem:[%s380] sm:$0xf] %vm364, %v378
        %382 = vrot.lane.b32.xlu0 %v368, 80
        %v383 = vpop.permute.xlu0 %382
        %s385 = scalar_lea.vmem %s286, 4 [#allocation8]
        %386 = vst.msk [vmem:[%s385] sm:$0xf] %vm364, %v383
        %387 = vrot.lane.b32.xlu0 %v368, 48
        %v388 = vpop.permute.xlu0 %387
        %s390 = scalar_lea.vmem %s293, 4 [#allocation10]
        %391 = vst.msk [vmem:[%s390] sm:$0xf] %vm364, %v388
        %s392 = sand.u32 %s119, 1
        %s393 = scalar_lea.sflag [#allocation4], %s392
        %s394 = sand.u32 %s119, 1
        %s395 = smul.addr %s394, 8
        %s396 = scalar_lea.vmem [#allocation7], %s395
        %s397 = sand.u32 %s27, 1
        %s398 = scalar_lea.sflag [#allocation9], %s397
        %s399 = sand.u32 %s147, 1
        %s400 = smul.addr %s399, 8
        %s401 = scalar_lea.vmem [#allocation8], %s400
        %s402 = sand.u32 %s27, 1
        %s403 = scalar_lea.sflag [#allocation9], %s402
        %s404 = sand.u32 %s175, 1
        %s405 = smul.addr %s404, 8
        %s406 = scalar_lea.vmem [#allocation10], %s405
        // Predicated region
        $region41: #{tpu_custom_call.1} parent=31 // pred_check
          %p407 = pneg %p129
        $region42: #{tpu_custom_call.1} parent=31 // pred_check_branch
          %409 = sbr.rel (%p407) target = $region44
        $region43: #{tpu_custom_call.1} parent=31 // pred_region
          %s411 = ssub.s32 128, 128
          %412 = vsyncadd %s393, %s411
          %s413 = smul.addr %s31, 2
          %s414 = sadd.s32 %s32, %s413
          %s415 = smul.addr %s414, 64
          %s416 = scalar_lea.hbm %s3, %s415
          %s417 = sshll.u32 %s396, 4
          %s418 = int_to_ptr.vmem [resolvable:$true] %s417
          %423 = dma.vmem_to_hbm [thread:$0]  %s418, 128, %s416, %s393, 64, 64, 4
        $region44: #{tpu_custom_call.1} parent=31 // pred_fallthru
          _
        // Predicated region
        $region45: #{tpu_custom_call.1} parent=31 // pred_check
          %p424 = pneg %p157
        $region46: #{tpu_custom_call.1} parent=31 // pred_check_branch
          %426 = sbr.rel (%p424) target = $region48
        $region47: #{tpu_custom_call.1} parent=31 // pred_region
          %s428 = ssub.s32 128, 128
          %429 = vsyncadd %s398, %s428
          %s430 = smul.addr %s31, 2
          %s431 = sadd.s32 %s32, %s430
          %s432 = smul.addr %s431, 64
          %s433 = scalar_lea.hbm %s4, %s432
          %s434 = sshll.u32 %s401, 4
          %s435 = int_to_ptr.vmem [resolvable:$true] %s434
          %440 = dma.vmem_to_hbm [thread:$0]  %s435, 128, %s433, %s398, 64, 64, 4
        $region48: #{tpu_custom_call.1} parent=31 // pred_fallthru
          _
        // Predicated region
        $region49: #{tpu_custom_call.1} parent=31 // pred_check
          %p441 = pneg %p185
        $region50: #{tpu_custom_call.1} parent=31 // pred_check_branch
          %443 = sbr.rel (%p441) target = $region52
        $region51: #{tpu_custom_call.1} parent=31 // pred_region
          %s445 = ssub.s32 128, 128
          %446 = vsyncadd %s403, %s445
          %s447 = smul.addr %s31, 2
          %s448 = sadd.s32 %s32, %s447
          %s449 = smul.addr %s448, 64
          %s450 = scalar_lea.hbm %s5, %s449
          %s451 = sshll.u32 %s406, 4
          %s452 = int_to_ptr.vmem [resolvable:$true] %s451
          %457 = dma.vmem_to_hbm [thread:$0]  %s452, 128, %s450, %s403, 64, 64, 4
        $region52: #{tpu_custom_call.1} parent=31 // pred_fallthru
          _
      $region32: #{tpu_custom_call.1} parent=5 // pred_fallthru
        _
      %p458 = scmp.le.s32.totalorder 2, %s22
      // Predicated region
      $region53: #{tpu_custom_call.1} parent=5 // pred_check
        %p459 = pneg %p458
      $region54: #{tpu_custom_call.1} parent=5 // pred_check_branch
        %461 = sbr.rel (%p459) target = $region56
      $region55: #{tpu_custom_call.1} parent=5 // pred_region
        %s462 = ssub.s32 %s22, 2
        // Predicated region
        $region57: #{tpu_custom_call.1} parent=55 // pred_check
          %p463 = pneg %p135
        $region58: #{tpu_custom_call.1} parent=55 // pred_check_branch
          %465 = sbr.rel (%p463) target = $region60
        $region59: #{tpu_custom_call.1} parent=55 // pred_region
          %s466 = sand.u32 %s120, 1
          %s467 = scalar_lea.sflag [#allocation4], %s466
          %s468 = sand.u32 %s120, 1
          %s469 = smul.addr %s468, 8
          %s470 = scalar_lea.vmem [#allocation7], %s469
          %471 = dma.done %s467, 128
        $region60: #{tpu_custom_call.1} parent=55 // pred_fallthru
          _
        // Predicated region
        $region61: #{tpu_custom_call.1} parent=55 // pred_check
          %p472 = pneg %p163
        $region62: #{tpu_custom_call.1} parent=55 // pred_check_branch
          %474 = sbr.rel (%p472) target = $region64
        $region63: #{tpu_custom_call.1} parent=55 // pred_region
          %s475 = sand.u32 %s28, 1
          %s476 = scalar_lea.sflag [#allocation9], %s475
          %s477 = sand.u32 %s148, 1
          %s478 = smul.addr %s477, 8
          %s479 = scalar_lea.vmem [#allocation8], %s478
          %480 = dma.done %s476, 128
        $region64: #{tpu_custom_call.1} parent=55 // pred_fallthru
          _
        // Predicated region
        $region65: #{tpu_custom_call.1} parent=55 // pred_check
          %p481 = pneg %p191
        $region66: #{tpu_custom_call.1} parent=55 // pred_check_branch
          %483 = sbr.rel (%p481) target = $region68
        $region67: #{tpu_custom_call.1} parent=55 // pred_region
          %s484 = sand.u32 %s28, 1
          %s485 = scalar_lea.sflag [#allocation9], %s484
          %s486 = sand.u32 %s176, 1
          %s487 = smul.addr %s486, 8
          %s488 = scalar_lea.vmem [#allocation10], %s487
          %489 = dma.done %s485, 128
        $region68: #{tpu_custom_call.1} parent=55 // pred_fallthru
          _
      $region56: #{tpu_custom_call.1} parent=5 // pred_fallthru
        _
    $region6: #{tpu_custom_call.1} parent=1 // loop_footer
      %s26 = sadd.s32 1, %s22
    $region7: #{tpu_custom_call.1} parent=1 // loop_footer_branch
      %21 = sbr.rel target = $region3
    $region8: #{tpu_custom_call.1} parent=1 // loop_exit
      _
    %490 = vsyncpa [#allocation3], 1
    %s491 = scalar_lea.sflag [#allocation3], 1
    %492 = vsyncpa %s491, 1
    %493 = vsyncpa [#allocation6], 1
    %494 = vsyncpa [#allocation4], 1
    %s495 = scalar_lea.sflag [#allocation4], 1
    %496 = vsyncpa %s495, 1
    %497 = vsyncpa [#allocation9], 1
    %s498 = scalar_lea.sflag [#allocation9], 1
    %499 = vsyncpa %s498, 1

</llo_original>
